<compile_context>
chip_gen: v5e
topology: v5e:2x2
jax: 0.10.0
libtpu: 0.0.40
codegen_flags: <defaults>
</compile_context>

<pallas_src>
import functools

import jax
import jax.numpy as jnp
from jax.experimental import pallas as pl
from jax.experimental.pallas import tpu as pltpu

_SUBLANES = 8          # f32 sublane count; row tiles are multiples of this
_NUM_QUANTITIES = 8    # number of reduced quantities


# ----------------------------- Pallas kernel ------------------------------ #
def _kd_tile_kernel(pred_ref, teacher_ref, smask_ref, tmask_ref,
                    partials_ref, negloss_ref, *, k, sub):
    h = pl.program_id(1)

    @pl.when(h == 0)
    def _():
        # This output block is revisited across the whole row-tile axis ->
        # it is the accumulator; zero it before the first tile so stale VMEM
        # never leaks into the sums.
        partials_ref[...] = jnp.zeros_like(partials_ref)

    shrink = pred_ref[0, 0].astype(jnp.float32)      # student shrink map
    thr    = pred_ref[0, 1].astype(jnp.float32)      # student threshold map
    binm   = pred_ref[0, 2].astype(jnp.float32)      # student binary map
    t0     = teacher_ref[0, 0].astype(jnp.float32)   # teacher channel 0 (gt)
    t1     = teacher_ref[0, 1].astype(jnp.float32)   # teacher channel 1
    smask  = smask_ref[0].astype(jnp.float32)
    tmask  = tmask_ref[0].astype(jnp.float32)

    # step_function: 1 / (1 + exp(-k * (x - y)));  exp + divide ride the EUP,
    # which is idle slack in this memory-bound kernel.
    teacher_binary = pl.reciprocal(1.0 + jnp.exp(-k * (t0 - t1)), approx=False)

    # Elementwise binary cross entropy (PyTorch clamps the logs at -100).
    log_p   = jnp.maximum(jnp.log(shrink), -100.0)
    log_1mp = jnp.maximum(jnp.log(1.0 - shrink), -100.0)
    bce = -(t0 * log_p + (1.0 - t0) * log_1mp)

    # .byte() on non-negative floats == truncation toward zero == floor here.
    positive = jnp.floor(t0 * smask)
    negative = jnp.floor((1.0 - t0) * smask)

    pos_loss = bce * positive
    neg_loss = bce * negative
    # TODO(synk): dynamic-k OHEM top-k has no static-shape Pallas equivalent;
    # the per-pixel negative-loss map is streamed out and the selection is
    # finished with a plain-JAX sort in the wrapper.
    negloss_ref[0] = neg_loss

    rows, w = neg_loss.shape

    def gsum(x):
        # (rows, W) -> (sub, W) group sum: pure vector adds over whole-vreg
        # rows (no cross-sublane XLU reduce).  The final combine over the
        # 'sub' rows happens once, outside the kernel, in plain JAX.
        if sub == 1:
            return x.sum(axis=0, keepdims=True)
        return x.reshape(rows // sub, sub, w).sum(axis=0)

    partials_ref[0, 0] += gsum(positive)                        # positive count
    partials_ref[0, 1] += gsum(negative)                        # negative count
    partials_ref[0, 2] += gsum(pos_loss)                        # positive BCE sum
    partials_ref[0, 3] += gsum(jnp.abs(thr - t1) * tmask)       # MaskL1 numerator
    partials_ref[0, 4] += gsum(tmask)                           # MaskL1 denominator
    partials_ref[0, 5] += gsum(binm * teacher_binary * smask)   # dice intersection
    partials_ref[0, 6] += gsum(binm * smask)                    # dice pred sum
    partials_ref[0, 7] += gsum(teacher_binary * smask)          # dice gt sum


# ------------------------------ kernel driver ------------------------------ #
def _choose_tile_h(H, W, budget_bytes):
    # ~8 f32 row-streams (3 pred + 2 teacher + 2 masks + 1 negloss output),
    # each double-buffered by the BlockSpec pipeline.
    per_row_bytes = 8 * W * 4 * 2
    max_rows = max(budget_bytes // per_row_bytes, _SUBLANES)
    best = 0
    d = _SUBLANES
    while d <= H:
        if H % d == 0 and d <= max_rows:
            best = d
        d += _SUBLANES
    if best:
        return best
    if H % _SUBLANES == 0:
        return _SUBLANES          # smallest legal multiple-of-8 tile
    return H                      # full-dim fallback (always a legal block dim)


def _run_kd_kernel(pred, teacher, smask, tmask, k, *,
                   tile_budget_bytes=16 << 20, vmem_limit_bytes=40 << 20):
    N, CP, H, W = pred.shape
    CT = teacher.shape[1]
    tile_h = _choose_tile_h(H, W, tile_budget_bytes)
    sub = _SUBLANES if tile_h % _SUBLANES == 0 else 1
    h_tiles = H // tile_h

    in_specs = [
        pl.BlockSpec((1, CP, tile_h, W), lambda n, h: (n, 0, h, 0)),
        pl.BlockSpec((1, CT, tile_h, W), lambda n, h: (n, 0, h, 0)),
        pl.BlockSpec((1, tile_h, W), lambda n, h: (n, h, 0)),
        pl.BlockSpec((1, tile_h, W), lambda n, h: (n, h, 0)),
    ]
    out_specs = (
        pl.BlockSpec((1, _NUM_QUANTITIES, sub, W), lambda n, h: (n, 0, 0, 0)),
        pl.BlockSpec((1, tile_h, W), lambda n, h: (n, h, 0)),
    )

    partials, negloss = pl.pallas_call(
        functools.partial(_kd_tile_kernel, k=k, sub=sub),
        out_shape=(
            jax.ShapeDtypeStruct((N, _NUM_QUANTITIES, sub, W), jnp.float32),
            jax.ShapeDtypeStruct((N, H, W), jnp.float32),
        ),
        grid=(N, h_tiles),
        in_specs=in_specs,
        out_specs=out_specs,
        compiler_params=pltpu.CompilerParams(
            dimension_semantics=("parallel", "arbitrary"),
            vmem_limit_bytes=vmem_limit_bytes),
    )(pred, teacher, smask, tmask)

    sums = jnp.sum(partials, axis=(0, 2, 3))   # (8,): one scalar per quantity
    return sums, negloss


# ------------------------------ KdLoss wrapper ----------------------------- #
def kd_loss(pred, teacher_outputs, batch, *, alpha=1.0, beta=10.0,
            ohem_ratio=3.0, eps=1e-6, k=50.0):
    """pred: (N, 3, H, W); teacher_outputs: (N, 2, H, W);
    batch: dict with 'shrink_mask' and 'threshold_mask' of shape (N, H, W)."""

    def as_float(x):
        return x if jnp.issubdtype(x.dtype, jnp.floating) else x.astype(jnp.float32)

    pred_f    = as_float(pred)
    teacher_f = as_float(teacher_outputs)
    smask     = as_float(batch['shrink_mask'])
    tmask     = as_float(batch['threshold_mask'])

    sums, negloss = _run_kd_kernel(pred_f, teacher_f, smask, tmask, k)
    (pos_sum, neg_sum, pos_loss_sum, l1_num, l1_den,
     inter, pred_sum, gt_sum) = [sums[q] for q in range(_NUM_QUANTITIES)]

    # --- BalanceCrossEntropyLoss (OHEM) ---
    pos_count = pos_sum.astype(jnp.int32)
    neg_count = jnp.minimum(
        neg_sum.astype(jnp.int32),
        (pos_count.astype(jnp.float32) * ohem_ratio).astype(jnp.int32))
    # TODO(synk): dynamic-k top-k has no static-shape Pallas equivalent;
    # emulated exactly in plain JAX with a descending sort + rank mask.
    neg_flat = negloss.reshape(-1)
    sorted_desc = -jnp.sort(-neg_flat)
    take = jnp.arange(sorted_desc.shape[0]) < neg_count
    topk_sum = jnp.sum(jnp.where(take, sorted_desc, 0.0))
    loss_shrink = (pos_loss_sum + topk_sum) / (
        pos_count.astype(jnp.float32) + neg_count.astype(jnp.float32) + eps)

    # --- MaskL1Loss ---
    loss_threshold = l1_num / (l1_den + eps)

    # --- DiceLoss ---
    loss_binary = 1.0 - 2.0 * inter / (pred_sum + gt_sum + eps)

    loss_all = alpha * loss_shrink + beta * loss_threshold + loss_binary
    return {'kd_loss': loss_all}


# ---------------------------------- main ----------------------------------- #
if __name__ == "__main__":
    key = jax.random.PRNGKey(0)
    k1, k2, k3, k4, k5 = jax.random.split(key, 5)

    N, H, W = 2, 16, 16

    # Student prediction: 3 channels (shrink, threshold, binary), in (0, 1).
    pred = jax.nn.sigmoid(jax.random.normal(k1, (N, 3, H, W), jnp.float32))

    # Teacher: channel 0 binary-like target, channel 1 continuous in (0, 1).
    t0 = (jax.random.uniform(k2, (N, 1, H, W)) > 0.5).astype(jnp.float32)
    t1 = jax.nn.sigmoid(jax.random.normal(k3, (N, 1, H, W), jnp.float32))
    teacher_outputs = jnp.concatenate([t0, t1], axis=1)

    batch = {
        'shrink_mask':    (jax.random.uniform(k4, (N, H, W)) > 0.3).astype(jnp.float32),
        'threshold_mask': (jax.random.uniform(k5, (N, H, W)) > 0.3).astype(jnp.float32),
    }

    fn = jax.jit(functools.partial(kd_loss, alpha=1.0, beta=10.0,
                                   ohem_ratio=3.0, eps=1e-6, k=50.0))
    metrics = fn(pred, teacher_outputs, batch)
    loss = jax.block_until_ready(metrics['kd_loss'])
    assert loss.shape == ()

    # Plain-JAX reference of the PyTorch module (sanity check of the kernel).
    def ref_kd_loss(pred, teacher, batch, alpha=1.0, beta=10.0,
                    ohem_ratio=3.0, eps=1e-6, k=50.0):
        shrink, thr, binm = pred[:, 0], pred[:, 1], pred[:, 2]
        t0c, t1c = teacher[:, 0], teacher[:, 1]
        sm, tm = batch['shrink_mask'], batch['threshold_mask']
        tb = 1.0 / (1.0 + jnp.exp(-k * (t0c - t1c)))
        bce = -(t0c * jnp.maximum(jnp.log(shrink), -100.0)
                + (1.0 - t0c) * jnp.maximum(jnp.log(1.0 - shrink), -100.0))
        positive = jnp.floor(t0c * sm)
        negative = jnp.floor((1.0 - t0c) * sm)
        pos_count = jnp.sum(positive).astype(jnp.int32)
        neg_count = jnp.minimum(
            jnp.sum(negative).astype(jnp.int32),
            (pos_count.astype(jnp.float32) * ohem_ratio).astype(jnp.int32))
        neg_sorted = -jnp.sort(-(bce * negative).reshape(-1))
        take = jnp.arange(neg_sorted.shape[0]) < neg_count
        loss_s = (jnp.sum(bce * positive) + jnp.sum(jnp.where(take, neg_sorted, 0.0))) / (
            pos_count.astype(jnp.float32) + neg_count.astype(jnp.float32) + eps)
        loss_t = jnp.sum(jnp.abs(thr - t1c) * tm) / (jnp.sum(tm) + eps)
        inter = jnp.sum(binm * tb * sm)
        union = jnp.sum(binm * sm) + jnp.sum(tb * sm) + eps
        loss_b = 1.0 - 2.0 * inter / union
        return alpha * loss_s + beta * loss_t + loss_b

    ref = ref_kd_loss(pred, teacher_outputs, batch)
    assert jnp.allclose(loss, ref, rtol=1e-4, atol=1e-5), (loss, ref)
    print("KERNEL_OK")
</pallas_src>

<mosaic_0001>
module attributes {stable_mosaic.version = 11 : i64} {
  func.func @_kd_tile_kernel(%arg0: i32, %arg1: i32, %arg2: memref<1x3x16x16xf32, #tpu.memory_space<vmem>>, %arg3: memref<1x2x16x16xf32, #tpu.memory_space<vmem>>, %arg4: memref<1x16x16xf32, #tpu.memory_space<vmem>>, %arg5: memref<1x16x16xf32, #tpu.memory_space<vmem>>, %arg6: memref<1x8x8x16xf32, #tpu.memory_space<vmem>>, %arg7: memref<1x16x16xf32, #tpu.memory_space<vmem>>) attributes {dimension_semantics = [#tpu.dimension_semantics<parallel>, #tpu.dimension_semantics<arbitrary>], iteration_bounds = array<i64: 2, 1>, scalar_prefetch = 0 : i64, scratch_operands = 0 : i64, tpu.core_type = #tpu.core_type<tc>, window_params = [{transform_indices = @transform_0, window_bounds = array<i64: 1, 3, 16, 16>}, {transform_indices = @transform_1, window_bounds = array<i64: 1, 2, 16, 16>}, {transform_indices = @transform_2, window_bounds = array<i64: 1, 16, 16>}, {transform_indices = @transform_3, window_bounds = array<i64: 1, 16, 16>}, {transform_indices = @transform_4, window_bounds = array<i64: 1, 8, 8, 16>}, {transform_indices = @transform_5, window_bounds = array<i64: 1, 16, 16>}]} {
    %c0_i32 = arith.constant 0 : i32
    %0 = arith.cmpi eq, %arg1, %c0_i32 : i32
    %1 = arith.extui %0 : i1 to i32
    %c0_i32_0 = arith.constant 0 : i32
    %2 = arith.cmpi ne, %1, %c0_i32_0 : i32
    scf.if %2 {
      %cst_101 = arith.constant 0.000000e+00 : f32
      %121 = vector.broadcast %cst_101 : f32 to vector<1x8x8x16xf32>
      %c0_102 = arith.constant 0 : index
      %c0_103 = arith.constant 0 : index
      %c0_104 = arith.constant 0 : index
      %c0_105 = arith.constant 0 : index
      %122 = vector.load %arg6[%c0_102, %c0_103, %c0_104, %c0_105] : memref<1x8x8x16xf32, #tpu.memory_space<vmem>>, vector<1x8x8x16xf32>
      tpu.vector_store %arg6[%c0_102, %c0_103, %c0_104, %c0_105], %121 {strides = array<i32>} : memref<1x8x8x16xf32, #tpu.memory_space<vmem>>, vector<1x8x8x16xf32>,
    } else {
    }
    %c0 = arith.constant 0 : index
    %c0_1 = arith.constant 0 : index
    %c0_2 = arith.constant 0 : index
    %c0_3 = arith.constant 0 : index
    %3 = vector.load %arg2[%c0, %c0_1, %c0_2, %c0_3] : memref<1x3x16x16xf32, #tpu.memory_space<vmem>>, vector<1x1x16x16xf32>
    %4 = vector.shape_cast %3 : vector<1x1x16x16xf32> to vector<16x16xf32>
    %c0_4 = arith.constant 0 : index
    %c1 = arith.constant 1 : index
    %c0_5 = arith.constant 0 : index
    %c0_6 = arith.constant 0 : index
    %5 = vector.load %arg2[%c0_4, %c1, %c0_5, %c0_6] : memref<1x3x16x16xf32, #tpu.memory_space<vmem>>, vector<1x1x16x16xf32>
    %6 = vector.shape_cast %5 : vector<1x1x16x16xf32> to vector<16x16xf32>
    %c0_7 = arith.constant 0 : index
    %c2 = arith.constant 2 : index
    %c0_8 = arith.constant 0 : index
    %c0_9 = arith.constant 0 : index
    %7 = vector.load %arg2[%c0_7, %c2, %c0_8, %c0_9] : memref<1x3x16x16xf32, #tpu.memory_space<vmem>>, vector<1x1x16x16xf32>
    %8 = vector.shape_cast %7 : vector<1x1x16x16xf32> to vector<16x16xf32>
    %c0_10 = arith.constant 0 : index
    %c0_11 = arith.constant 0 : index
    %c0_12 = arith.constant 0 : index
    %c0_13 = arith.constant 0 : index
    %9 = vector.load %arg3[%c0_10, %c0_11, %c0_12, %c0_13] : memref<1x2x16x16xf32, #tpu.memory_space<vmem>>, vector<1x1x16x16xf32>
    %10 = vector.shape_cast %9 : vector<1x1x16x16xf32> to vector<16x16xf32>
    %c0_14 = arith.constant 0 : index
    %c1_15 = arith.constant 1 : index
    %c0_16 = arith.constant 0 : index
    %c0_17 = arith.constant 0 : index
    %11 = vector.load %arg3[%c0_14, %c1_15, %c0_16, %c0_17] : memref<1x2x16x16xf32, #tpu.memory_space<vmem>>, vector<1x1x16x16xf32>
    %12 = vector.shape_cast %11 : vector<1x1x16x16xf32> to vector<16x16xf32>
    %c0_18 = arith.constant 0 : index
    %c0_19 = arith.constant 0 : index
    %c0_20 = arith.constant 0 : index
    %13 = vector.load %arg4[%c0_18, %c0_19, %c0_20] : memref<1x16x16xf32, #tpu.memory_space<vmem>>, vector<1x16x16xf32>
    %14 = vector.shape_cast %13 : vector<1x16x16xf32> to vector<16x16xf32>
    %c0_21 = arith.constant 0 : index
    %c0_22 = arith.constant 0 : index
    %c0_23 = arith.constant 0 : index
    %15 = vector.load %arg5[%c0_21, %c0_22, %c0_23] : memref<1x16x16xf32, #tpu.memory_space<vmem>>, vector<1x16x16xf32>
    %16 = vector.shape_cast %15 : vector<1x16x16xf32> to vector<16x16xf32>
    %17 = arith.subf %10, %12 : vector<16x16xf32>
    %cst = arith.constant -5.000000e+01 : f32
    %18 = vector.broadcast %cst : f32 to vector<16x16xf32>
    %19 = arith.mulf %18, %17 : vector<16x16xf32>
    %20 = math.exp %19 : vector<16x16xf32>
    %cst_24 = arith.constant 1.000000e+00 : f32
    %21 = vector.broadcast %cst_24 : f32 to vector<16x16xf32>
    %22 = arith.addf %21, %20 : vector<16x16xf32>
    %23 = tpu.reciprocal %22 : vector<16x16xf32> -> vector<16x16xf32>
    %24 = math.log %4 : vector<16x16xf32>
    %cst_25 = arith.constant -1.000000e+02 : f32
    %25 = vector.broadcast %cst_25 : f32 to vector<16x16xf32>
    %26 = arith.maximumf %24, %25 : vector<16x16xf32>
    %cst_26 = arith.constant 1.000000e+00 : f32
    %27 = vector.broadcast %cst_26 : f32 to vector<16x16xf32>
    %28 = arith.subf %27, %4 : vector<16x16xf32>
    %29 = math.log %28 : vector<16x16xf32>
    %cst_27 = arith.constant -1.000000e+02 : f32
    %30 = vector.broadcast %cst_27 : f32 to vector<16x16xf32>
    %31 = arith.maximumf %29, %30 : vector<16x16xf32>
    %32 = arith.mulf %10, %26 : vector<16x16xf32>
    %cst_28 = arith.constant 1.000000e+00 : f32
    %33 = vector.broadcast %cst_28 : f32 to vector<16x16xf32>
    %34 = arith.subf %33, %10 : vector<16x16xf32>
    %35 = arith.mulf %34, %31 : vector<16x16xf32>
    %36 = arith.addf %32, %35 : vector<16x16xf32>
    %cst_29 = arith.constant 0.000000e+00 : f32
    %37 = vector.broadcast %cst_29 : f32 to vector<16x16xf32>
    %38 = arith.subf %37, %36 : vector<16x16xf32>
    %39 = arith.mulf %10, %14 : vector<16x16xf32>
    %40 = math.floor %39 : vector<16x16xf32>
    %cst_30 = arith.constant 1.000000e+00 : f32
    %41 = vector.broadcast %cst_30 : f32 to vector<16x16xf32>
    %42 = arith.subf %41, %10 : vector<16x16xf32>
    %43 = arith.mulf %42, %14 : vector<16x16xf32>
    %44 = math.floor %43 : vector<16x16xf32>
    %45 = arith.mulf %38, %40 : vector<16x16xf32>
    %46 = arith.mulf %38, %44 : vector<16x16xf32>
    %c0_31 = arith.constant 0 : index
    %c0_32 = arith.constant 0 : index
    %c0_33 = arith.constant 0 : index
    %47 = vector.load %arg7[%c0_31, %c0_32, %c0_33] : memref<1x16x16xf32, #tpu.memory_space<vmem>>, vector<1x16x16xf32>
    %48 = vector.shape_cast %47 : vector<1x16x16xf32> to vector<16x16xf32>
    %49 = vector.shape_cast %46 : vector<16x16xf32> to vector<1x16x16xf32>
    tpu.vector_store %arg7[%c0_31, %c0_32, %c0_33], %49 {strides = array<i32>} : memref<1x16x16xf32, #tpu.memory_space<vmem>>, vector<1x16x16xf32>,
    %c0_34 = arith.constant 0 : index
    %c0_35 = arith.constant 0 : index
    %c0_36 = arith.constant 0 : index
    %c0_37 = arith.constant 0 : index
    %50 = vector.load %arg6[%c0_34, %c0_35, %c0_36, %c0_37] : memref<1x8x8x16xf32, #tpu.memory_space<vmem>>, vector<1x1x8x16xf32>
    %51 = vector.shape_cast %50 : vector<1x1x8x16xf32> to vector<8x16xf32>
    %52 = vector.shape_cast %40 : vector<16x16xf32> to vector<2x8x16xf32>
    %cst_38 = arith.constant dense<0.000000e+00> : vector<8x16xf32>
    %53 = vector.multi_reduction <add>, %52, %cst_38 [0] : vector<2x8x16xf32> to vector<8x16xf32>
    %54 = arith.addf %51, %53 : vector<8x16xf32>
    %c0_39 = arith.constant 0 : index
    %c0_40 = arith.constant 0 : index
    %c0_41 = arith.constant 0 : index
    %c0_42 = arith.constant 0 : index
    %55 = vector.load %arg6[%c0_39, %c0_40, %c0_41, %c0_42] : memref<1x8x8x16xf32, #tpu.memory_space<vmem>>, vector<1x1x8x16xf32>
    %56 = vector.shape_cast %55 : vector<1x1x8x16xf32> to vector<8x16xf32>
    %57 = vector.shape_cast %54 : vector<8x16xf32> to vector<1x1x8x16xf32>
    tpu.vector_store %arg6[%c0_39, %c0_40, %c0_41, %c0_42], %57 {strides = array<i32>} : memref<1x8x8x16xf32, #tpu.memory_space<vmem>>, vector<1x1x8x16xf32>,
    %c0_43 = arith.constant 0 : index
    %c1_44 = arith.constant 1 : index
    %c0_45 = arith.constant 0 : index
    %c0_46 = arith.constant 0 : index
    %58 = vector.load %arg6[%c0_43, %c1_44, %c0_45, %c0_46] : memref<1x8x8x16xf32, #tpu.memory_space<vmem>>, vector<1x1x8x16xf32>
    %59 = vector.shape_cast %58 : vector<1x1x8x16xf32> to vector<8x16xf32>
    %60 = vector.shape_cast %44 : vector<16x16xf32> to vector<2x8x16xf32>
    %cst_47 = arith.constant dense<0.000000e+00> : vector<8x16xf32>
    %61 = vector.multi_reduction <add>, %60, %cst_47 [0] : vector<2x8x16xf32> to vector<8x16xf32>
    %62 = arith.addf %59, %61 : vector<8x16xf32>
    %c0_48 = arith.constant 0 : index
    %c1_49 = arith.constant 1 : index
    %c0_50 = arith.constant 0 : index
    %c0_51 = arith.constant 0 : index
    %63 = vector.load %arg6[%c0_48, %c1_49, %c0_50, %c0_51] : memref<1x8x8x16xf32, #tpu.memory_space<vmem>>, vector<1x1x8x16xf32>
    %64 = vector.shape_cast %63 : vector<1x1x8x16xf32> to vector<8x16xf32>
    %65 = vector.shape_cast %62 : vector<8x16xf32> to vector<1x1x8x16xf32>
    tpu.vector_store %arg6[%c0_48, %c1_49, %c0_50, %c0_51], %65 {strides = array<i32>} : memref<1x8x8x16xf32, #tpu.memory_space<vmem>>, vector<1x1x8x16xf32>,
    %c0_52 = arith.constant 0 : index
    %c2_53 = arith.constant 2 : index
    %c0_54 = arith.constant 0 : index
    %c0_55 = arith.constant 0 : index
    %66 = vector.load %arg6[%c0_52, %c2_53, %c0_54, %c0_55] : memref<1x8x8x16xf32, #tpu.memory_space<vmem>>, vector<1x1x8x16xf32>
    %67 = vector.shape_cast %66 : vector<1x1x8x16xf32> to vector<8x16xf32>
    %68 = vector.shape_cast %45 : vector<16x16xf32> to vector<2x8x16xf32>
    %cst_56 = arith.constant dense<0.000000e+00> : vector<8x16xf32>
    %69 = vector.multi_reduction <add>, %68, %cst_56 [0] : vector<2x8x16xf32> to vector<8x16xf32>
    %70 = arith.addf %67, %69 : vector<8x16xf32>
    %c0_57 = arith.constant 0 : index
    %c2_58 = arith.constant 2 : index
    %c0_59 = arith.constant 0 : index
    %c0_60 = arith.constant 0 : index
    %71 = vector.load %arg6[%c0_57, %c2_58, %c0_59, %c0_60] : memref<1x8x8x16xf32, #tpu.memory_space<vmem>>, vector<1x1x8x16xf32>
    %72 = vector.shape_cast %71 : vector<1x1x8x16xf32> to vector<8x16xf32>
    %73 = vector.shape_cast %70 : vector<8x16xf32> to vector<1x1x8x16xf32>
    tpu.vector_store %arg6[%c0_57, %c2_58, %c0_59, %c0_60], %73 {strides = array<i32>} : memref<1x8x8x16xf32, #tpu.memory_space<vmem>>, vector<1x1x8x16xf32>,
    %c0_61 = arith.constant 0 : index
    %c3 = arith.constant 3 : index
    %c0_62 = arith.constant 0 : index
    %c0_63 = arith.constant 0 : index
    %74 = vector.load %arg6[%c0_61, %c3, %c0_62, %c0_63] : memref<1x8x8x16xf32, #tpu.memory_space<vmem>>, vector<1x1x8x16xf32>
    %75 = vector.shape_cast %74 : vector<1x1x8x16xf32> to vector<8x16xf32>
    %76 = arith.subf %6, %12 : vector<16x16xf32>
    %77 = math.absf %76 : vector<16x16xf32>
    %78 = arith.mulf %77, %16 : vector<16x16xf32>
    %79 = vector.shape_cast %78 : vector<16x16xf32> to vector<2x8x16xf32>
    %cst_64 = arith.constant dense<0.000000e+00> : vector<8x16xf32>
    %80 = vector.multi_reduction <add>, %79, %cst_64 [0] : vector<2x8x16xf32> to vector<8x16xf32>
    %81 = arith.addf %75, %80 : vector<8x16xf32>
    %c0_65 = arith.constant 0 : index
    %c3_66 = arith.constant 3 : index
    %c0_67 = arith.constant 0 : index
    %c0_68 = arith.constant 0 : index
    %82 = vector.load %arg6[%c0_65, %c3_66, %c0_67, %c0_68] : memref<1x8x8x16xf32, #tpu.memory_space<vmem>>, vector<1x1x8x16xf32>
    %83 = vector.shape_cast %82 : vector<1x1x8x16xf32> to vector<8x16xf32>
    %84 = vector.shape_cast %81 : vector<8x16xf32> to vector<1x1x8x16xf32>
    tpu.vector_store %arg6[%c0_65, %c3_66, %c0_67, %c0_68], %84 {strides = array<i32>} : memref<1x8x8x16xf32, #tpu.memory_space<vmem>>, vector<1x1x8x16xf32>,
    %c0_69 = arith.constant 0 : index
    %c4 = arith.constant 4 : index
    %c0_70 = arith.constant 0 : index
    %c0_71 = arith.constant 0 : index
    %85 = vector.load %arg6[%c0_69, %c4, %c0_70, %c0_71] : memref<1x8x8x16xf32, #tpu.memory_space<vmem>>, vector<1x1x8x16xf32>
    %86 = vector.shape_cast %85 : vector<1x1x8x16xf32> to vector<8x16xf32>
    %87 = vector.shape_cast %16 : vector<16x16xf32> to vector<2x8x16xf32>
    %cst_72 = arith.constant dense<0.000000e+00> : vector<8x16xf32>
    %88 = vector.multi_reduction <add>, %87, %cst_72 [0] : vector<2x8x16xf32> to vector<8x16xf32>
    %89 = arith.addf %86, %88 : vector<8x16xf32>
    %c0_73 = arith.constant 0 : index
    %c4_74 = arith.constant 4 : index
    %c0_75 = arith.constant 0 : index
    %c0_76 = arith.constant 0 : index
    %90 = vector.load %arg6[%c0_73, %c4_74, %c0_75, %c0_76] : memref<1x8x8x16xf32, #tpu.memory_space<vmem>>, vector<1x1x8x16xf32>
    %91 = vector.shape_cast %90 : vector<1x1x8x16xf32> to vector<8x16xf32>
    %92 = vector.shape_cast %89 : vector<8x16xf32> to vector<1x1x8x16xf32>
    tpu.vector_store %arg6[%c0_73, %c4_74, %c0_75, %c0_76], %92 {strides = array<i32>} : memref<1x8x8x16xf32, #tpu.memory_space<vmem>>, vector<1x1x8x16xf32>,
    %c0_77 = arith.constant 0 : index
    %c5 = arith.constant 5 : index
    %c0_78 = arith.constant 0 : index
    %c0_79 = arith.constant 0 : index
    %93 = vector.load %arg6[%c0_77, %c5, %c0_78, %c0_79] : memref<1x8x8x16xf32, #tpu.memory_space<vmem>>, vector<1x1x8x16xf32>
    %94 = vector.shape_cast %93 : vector<1x1x8x16xf32> to vector<8x16xf32>
    %95 = arith.mulf %8, %23 : vector<16x16xf32>
    %96 = arith.mulf %95, %14 : vector<16x16xf32>
    %97 = vector.shape_cast %96 : vector<16x16xf32> to vector<2x8x16xf32>
    %cst_80 = arith.constant dense<0.000000e+00> : vector<8x16xf32>
    %98 = vector.multi_reduction <add>, %97, %cst_80 [0] : vector<2x8x16xf32> to vector<8x16xf32>
    %99 = arith.addf %94, %98 : vector<8x16xf32>
    %c0_81 = arith.constant 0 : index
    %c5_82 = arith.constant 5 : index
    %c0_83 = arith.constant 0 : index
    %c0_84 = arith.constant 0 : index
    %100 = vector.load %arg6[%c0_81, %c5_82, %c0_83, %c0_84] : memref<1x8x8x16xf32, #tpu.memory_space<vmem>>, vector<1x1x8x16xf32>
    %101 = vector.shape_cast %100 : vector<1x1x8x16xf32> to vector<8x16xf32>
    %102 = vector.shape_cast %99 : vector<8x16xf32> to vector<1x1x8x16xf32>
    tpu.vector_store %arg6[%c0_81, %c5_82, %c0_83, %c0_84], %102 {strides = array<i32>} : memref<1x8x8x16xf32, #tpu.memory_space<vmem>>, vector<1x1x8x16xf32>,
    %c0_85 = arith.constant 0 : index
    %c6 = arith.constant 6 : index
    %c0_86 = arith.constant 0 : index
    %c0_87 = arith.constant 0 : index
    %103 = vector.load %arg6[%c0_85, %c6, %c0_86, %c0_87] : memref<1x8x8x16xf32, #tpu.memory_space<vmem>>, vector<1x1x8x16xf32>
    %104 = vector.shape_cast %103 : vector<1x1x8x16xf32> to vector<8x16xf32>
    %105 = arith.mulf %8, %14 : vector<16x16xf32>
    %106 = vector.shape_cast %105 : vector<16x16xf32> to vector<2x8x16xf32>
    %cst_88 = arith.constant dense<0.000000e+00> : vector<8x16xf32>
    %107 = vector.multi_reduction <add>, %106, %cst_88 [0] : vector<2x8x16xf32> to vector<8x16xf32>
    %108 = arith.addf %104, %107 : vector<8x16xf32>
    %c0_89 = arith.constant 0 : index
    %c6_90 = arith.constant 6 : index
    %c0_91 = arith.constant 0 : index
    %c0_92 = arith.constant 0 : index
    %109 = vector.load %arg6[%c0_89, %c6_90, %c0_91, %c0_92] : memref<1x8x8x16xf32, #tpu.memory_space<vmem>>, vector<1x1x8x16xf32>
    %110 = vector.shape_cast %109 : vector<1x1x8x16xf32> to vector<8x16xf32>
    %111 = vector.shape_cast %108 : vector<8x16xf32> to vector<1x1x8x16xf32>
    tpu.vector_store %arg6[%c0_89, %c6_90, %c0_91, %c0_92], %111 {strides = array<i32>} : memref<1x8x8x16xf32, #tpu.memory_space<vmem>>, vector<1x1x8x16xf32>,
    %c0_93 = arith.constant 0 : index
    %c7 = arith.constant 7 : index
    %c0_94 = arith.constant 0 : index
    %c0_95 = arith.constant 0 : index
    %112 = vector.load %arg6[%c0_93, %c7, %c0_94, %c0_95] : memref<1x8x8x16xf32, #tpu.memory_space<vmem>>, vector<1x1x8x16xf32>
    %113 = vector.shape_cast %112 : vector<1x1x8x16xf32> to vector<8x16xf32>
    %114 = arith.mulf %23, %14 : vector<16x16xf32>
    %115 = vector.shape_cast %114 : vector<16x16xf32> to vector<2x8x16xf32>
    %cst_96 = arith.constant dense<0.000000e+00> : vector<8x16xf32>
    %116 = vector.multi_reduction <add>, %115, %cst_96 [0] : vector<2x8x16xf32> to vector<8x16xf32>
    %117 = arith.addf %113, %116 : vector<8x16xf32>
    %c0_97 = arith.constant 0 : index
    %c7_98 = arith.constant 7 : index
    %c0_99 = arith.constant 0 : index
    %c0_100 = arith.constant 0 : index
    %118 = vector.load %arg6[%c0_97, %c7_98, %c0_99, %c0_100] : memref<1x8x8x16xf32, #tpu.memory_space<vmem>>, vector<1x1x8x16xf32>
    %119 = vector.shape_cast %118 : vector<1x1x8x16xf32> to vector<8x16xf32>
    %120 = vector.shape_cast %117 : vector<8x16xf32> to vector<1x1x8x16xf32>
    tpu.vector_store %arg6[%c0_97, %c7_98, %c0_99, %c0_100], %120 {strides = array<i32>} : memref<1x8x8x16xf32, #tpu.memory_space<vmem>>, vector<1x1x8x16xf32>,
    return
  }
  func.func @transform_0(%arg0: i32, %arg1: i32) -> (i32, i32, i32, i32) {
    %c0_i32 = arith.constant 0 : i32
    %c0_i32_0 = arith.constant 0 : i32
    %c0_i32_1 = arith.constant 0 : i32
    return %arg0, %c0_i32, %arg1, %c0_i32_0 : i32, i32, i32, i32
  }
  func.func @transform_1(%arg0: i32, %arg1: i32) -> (i32, i32, i32, i32) {
    %c0_i32 = arith.constant 0 : i32
    %c0_i32_0 = arith.constant 0 : i32
    %c0_i32_1 = arith.constant 0 : i32
    return %arg0, %c0_i32, %arg1, %c0_i32_0 : i32, i32, i32, i32
  }
  func.func @transform_2(%arg0: i32, %arg1: i32) -> (i32, i32, i32) {
    %c0_i32 = arith.constant 0 : i32
    %c0_i32_0 = arith.constant 0 : i32
    return %arg0, %arg1, %c0_i32 : i32, i32, i32
  }
  func.func @transform_3(%arg0: i32, %arg1: i32) -> (i32, i32, i32) {
    %c0_i32 = arith.constant 0 : i32
    %c0_i32_0 = arith.constant 0 : i32
    return %arg0, %arg1, %c0_i32 : i32, i32, i32
  }
  func.func @transform_4(%arg0: i32, %arg1: i32) -> (i32, i32, i32, i32) {
    %c0_i32 = arith.constant 0 : i32
    %c0_i32_0 = arith.constant 0 : i32
    %c0_i32_1 = arith.constant 0 : i32
    %c0_i32_2 = arith.constant 0 : i32
    return %arg0, %c0_i32, %c0_i32_0, %c0_i32_1 : i32, i32, i32, i32
  }
  func.func @transform_5(%arg0: i32, %arg1: i32) -> (i32, i32, i32) {
    %c0_i32 = arith.constant 0 : i32
    %c0_i32_0 = arith.constant 0 : i32
    return %arg0, %arg1, %c0_i32 : i32, i32, i32
  }
}

</mosaic_0001>

<llo_original>
// kernel: neg.0
$region0: #{neg.0}
  #allocation0 [shape = 's32[1]{0}', space=sflag, size = 0x4, scoped, tag = 'scoped memory for neg.0']
  %s0 = inlined_call_operand.vmem [shape: f32[2,16,16], index: 0, kind: input, shape index: {}]
  %s1 = inlined_call_operand.vmem [shape: f32[2,16,16], index: 1, kind: output, shape index: {}]
  %v2 = vld [vmem:[%s0] sm:$0xff]
  %3 = xla_tuple %v2
  %4 = xla_tuple %3
  %v5 = vxor.u32 %v2, 2147483648
  %6 = xla_tuple %v5
  %7 = vst [vmem:[%s1] sm:$0xff] %v5
  %s8 = scalar_lea.vmem %s0, 16
  %v9 = vld [vmem:[%s8] sm:$0xff]
  %10 = xla_tuple %v9
  %11 = xla_tuple %10
  %v12 = vxor.u32 %v9, 2147483648
  %13 = xla_tuple %v12
  %s14 = scalar_lea.vmem %s1, 16
  %15 = vst [vmem:[%s14] sm:$0xff] %v12
  %s16 = scalar_lea.vmem %s0, 8
  %v17 = vld [vmem:[%s16] sm:$0xff]
  %18 = xla_tuple %v17
  %19 = xla_tuple %18
  %v20 = vxor.u32 %v17, 2147483648
  %21 = xla_tuple %v20
  %s22 = scalar_lea.vmem %s1, 8
  %23 = vst [vmem:[%s22] sm:$0xff] %v20
  %s24 = scalar_lea.vmem %s0, 24
  %v25 = vld [vmem:[%s24] sm:$0xff]
  %26 = xla_tuple %v25
  %27 = xla_tuple %26
  %v28 = vxor.u32 %v25, 2147483648
  %29 = xla_tuple %v28
  %s30 = scalar_lea.vmem %s1, 24
  %31 = vst [vmem:[%s30] sm:$0xff] %v28

// kernel: kd_loss.1
$region0: #{kd_loss.1}
  #allocation0 [shape = 'u32[]', space=smem, size = 0x4, offset = 0x4, fixed_abs, tag = 'smem constant byte address 0x4 - core index']
  #allocation1 [shape = 'u32[72,128]{1,0:T(1,128)}', space=vmem, size = 0x9000, scoped, tag = 'internal scratch']
  %s0 = inlined_call_operand.hbm [shape: f32[2,3,16,16], index: 0, kind: input, shape index: {}]
  %s1 = inlined_call_operand.hbm [shape: f32[2,2,16,16], index: 1, kind: input, shape index: {}]
  %s2 = inlined_call_operand.hbm [shape: f32[2,16,16], index: 2, kind: input, shape index: {}]
  %s3 = inlined_call_operand.hbm [shape: f32[2,16,16], index: 3, kind: input, shape index: {}]
  %s4 = inlined_call_operand.vmem [shape: f32[2,8,8,16], index: 4, kind: output, shape index: {0}]
  %s5 = inlined_call_operand.vmem [shape: f32[2,16,16], index: 5, kind: output, shape index: {1}]
  %6 = xla_tuple %s4, %s5
  %s7 = sld [smem:[#allocation0]]
  $region77: #{kd_loss.1} parent=0
    _
  %s9 = ssub.s32 1, %s7
  %s10 = scalar_select 0, %s9, %s7
  $region1: #{kd_loss.1} parent=0
    #allocation2 [shape = 'u8[49152]{0}', space=vmem, size = 0xc000, scoped, tag = 'input window, operand 0']
    #allocation3 [shape = 's32[2]{0}', space=sflag, size = 0x8, scoped, tag = 'scoped memory for kd_loss.1']
    #allocation4 [shape = 'u8[32768]{0}', space=vmem, size = 0x8000, scoped, tag = 'input window, operand 1']
    #allocation5 [shape = 's32[2]{0}', space=sflag, size = 0x8, scoped, tag = 'scoped memory for kd_loss.1']
    #allocation6 [shape = 'u8[16384]{0}', space=vmem, size = 0x4000, scoped, tag = 'input window, operand 2']
    #allocation7 [shape = 'u8[16384]{0}', space=vmem, size = 0x4000, scoped, tag = 'input window, operand 3']
    #allocation8 [shape = 's32[2]{0}', space=sflag, size = 0x8, scoped, tag = 'scoped memory for kd_loss.1']
    %11 = vsyncpa [#allocation3], 0
    %s12 = scalar_lea.sflag [#allocation3], 1
    %13 = vsyncpa %s12, 0
    %14 = vsyncpa [#allocation5], 0
    %s15 = scalar_lea.sflag [#allocation5], 1
    %16 = vsyncpa %s15, 0
    %17 = vsyncpa [#allocation8], 0
    %s18 = scalar_lea.sflag [#allocation8], 1
    %19 = vsyncpa %s18, 0
    loop: start=0, step=1, limit=4
    $region2: #{kd_loss.1} parent=1 // loop_pre_header
      _
    $region3: #{kd_loss.1} parent=1 // loop_header
      %s21 = sphi 0, %s25
      %p22 = scmp.ge.s32.totalorder %s21, 4
      %s28 = sphi 0, %s40
      %s29 = sphi 0, %s36
      %s30 = sphi 0, %s28
      %s31 = sphi 0, %s29
      %s32 = sphi 0, %s30
      %s33 = sphi 0, %s31
      %s45 = sphi 0, %s47
      %s48 = sphi 0, %s45
      %s49 = sphi 0, %s48
      %s65 = sphi 0, %s49
      %s73 = sphi 0, %s75
      %s76 = sphi 0, %s73
      %s77 = sphi 0, %s76
      %s93 = sphi 0, %s77
      %s101 = sphi 0, %s103
      %s104 = sphi 0, %s101
      %s105 = sphi 0, %s104
      %s121 = sphi 0, %s105
      %s129 = sphi 0, %s131
      %s132 = sphi 0, %s129
      %s133 = sphi 0, %s132
      %s149 = sphi 0, %s133
      %s155 = sphi 0, %s157
      %s158 = sphi 0, %s155
      %s159 = sphi 0, %s158
      %s175 = sphi 0, %s159
      %s183 = sphi 0, %s185
      %s186 = sphi 0, %s183
      %s187 = sphi 0, %s186
      %s203 = sphi 0, %s187
    $region4: #{kd_loss.1} parent=1 // loop_header_branch
      %24 = sbr.rel (%p22) target = $region8
    $region5: #{kd_loss.1} parent=1 // loop_body
      %s26 = ssub.s32 %s21, 1
      %s27 = ssub.s32 %s21, 2
      %s34 = sadd.s32 1, %s29
      %p35 = scmp.ge.s32.totalorder %s34, 1
      %s36 = scalar_select %p35, 0, %s34
      %s37 = sadd.s32 1, %s28
      %s38 = scalar_select %p35, %s37, %s28
      %p39 = scmp.ge.s32.totalorder %s38, 2
      %s40 = scalar_select %p39, 0, %s38
      %s41 = ssub.s32 %s28, %s40
      %s42 = ssub.s32 %s29, %s36
      %s43 = sor.u32 %s41, %s42
      %p44 = scmp.eq.s32.totalorder %s43, 0
      %s46 = sadd.s32 %s45, 1
      %s47 = scalar_select %p44, %s45, %s46
      %p50 = pneg %p44
      %p51 = scmp.eq.s32.totalorder %s21, 1
      %p52 = por %p50, %p51
      %p53 = scmp.ne.s32.totalorder %s45, %s48
      %p54 = scmp.eq.s32.totalorder %s21, 0
      %p55 = por %p53, %p54
      %p56 = scmp.ne.s32.totalorder %s45, %s48
      %p57 = scmp.eq.s32.totalorder %s26, 1
      %p58 = por %p56, %p57
      %p59 = scmp.ne.s32.totalorder %s48, %s49
      %p60 = scmp.eq.s32.totalorder %s26, 0
      %p61 = por %p59, %p60
      %p62 = scmp.ne.s32.totalorder %s48, %s49
      %p63 = scmp.eq.s32.totalorder %s27, 1
      %p64 = por %p62, %p63
      %p66 = scmp.ne.s32.totalorder %s49, %s65
      %p67 = scmp.eq.s32.totalorder %s27, 0
      %p68 = por %p66, %p67
      %s69 = ssub.s32 %s28, %s40
      %s70 = ssub.s32 %s29, %s36
      %s71 = sor.u32 %s69, %s70
      %p72 = scmp.eq.s32.totalorder %s71, 0
      %s74 = sadd.s32 %s73, 1
      %s75 = scalar_select %p72, %s73, %s74
      %p78 = pneg %p72
      %p79 = scmp.eq.s32.totalorder %s21, 1
      %p80 = por %p78, %p79
      %p81 = scmp.ne.s32.totalorder %s73, %s76
      %p82 = scmp.eq.s32.totalorder %s21, 0
      %p83 = por %p81, %p82
      %p84 = scmp.ne.s32.totalorder %s73, %s76
      %p85 = scmp.eq.s32.totalorder %s26, 1
      %p86 = por %p84, %p85
      %p87 = scmp.ne.s32.totalorder %s76, %s77
      %p88 = scmp.eq.s32.totalorder %s26, 0
      %p89 = por %p87, %p88
      %p90 = scmp.ne.s32.totalorder %s76, %s77
      %p91 = scmp.eq.s32.totalorder %s27, 1
      %p92 = por %p90, %p91
      %p94 = scmp.ne.s32.totalorder %s77, %s93
      %p95 = scmp.eq.s32.totalorder %s27, 0
      %p96 = por %p94, %p95
      %s97 = ssub.s32 %s28, %s40
      %s98 = ssub.s32 %s29, %s36
      %s99 = sor.u32 %s97, %s98
      %p100 = scmp.eq.s32.totalorder %s99, 0
      %s102 = sadd.s32 %s101, 1
      %s103 = scalar_select %p100, %s101, %s102
      %p106 = pneg %p100
      %p107 = scmp.eq.s32.totalorder %s21, 1
      %p108 = por %p106, %p107
      %p109 = scmp.ne.s32.totalorder %s101, %s104
      %p110 = scmp.eq.s32.totalorder %s21, 0
      %p111 = por %p109, %p110
      %p112 = scmp.ne.s32.totalorder %s101, %s104
      %p113 = scmp.eq.s32.totalorder %s26, 1
      %p114 = por %p112, %p113
      %p115 = scmp.ne.s32.totalorder %s104, %s105
      %p116 = scmp.eq.s32.totalorder %s26, 0
      %p117 = por %p115, %p116
      %p118 = scmp.ne.s32.totalorder %s104, %s105
      %p119 = scmp.eq.s32.totalorder %s27, 1
      %p120 = por %p118, %p119
      %p122 = scmp.ne.s32.totalorder %s105, %s121
      %p123 = scmp.eq.s32.totalorder %s27, 0
      %p124 = por %p122, %p123
      %s125 = ssub.s32 %s28, %s40
      %s126 = ssub.s32 %s29, %s36
      %s127 = sor.u32 %s125, %s126
      %p128 = scmp.eq.s32.totalorder %s127, 0
      %s130 = sadd.s32 %s129, 1
      %s131 = scalar_select %p128, %s129, %s130
      %p134 = pneg %p128
      %p135 = scmp.eq.s32.totalorder %s21, 1
      %p136 = por %p134, %p135
      %p137 = scmp.ne.s32.totalorder %s129, %s132
      %p138 = scmp.eq.s32.totalorder %s21, 0
      %p139 = por %p137, %p138
      %p140 = scmp.ne.s32.totalorder %s129, %s132
      %p141 = scmp.eq.s32.totalorder %s26, 1
      %p142 = por %p140, %p141
      %p143 = scmp.ne.s32.totalorder %s132, %s133
      %p144 = scmp.eq.s32.totalorder %s26, 0
      %p145 = por %p143, %p144
      %p146 = scmp.ne.s32.totalorder %s132, %s133
      %p147 = scmp.eq.s32.totalorder %s27, 1
      %p148 = por %p146, %p147
      %p150 = scmp.ne.s32.totalorder %s133, %s149
      %p151 = scmp.eq.s32.totalorder %s27, 0
      %p152 = por %p150, %p151
      %s153 = ssub.s32 %s28, %s40
      %p154 = scmp.eq.s32.totalorder %s153, 0
      %s156 = sadd.s32 %s155, 1
      %s157 = scalar_select %p154, %s155, %s156
      %p160 = pneg %p154
      %p161 = scmp.eq.s32.totalorder %s21, 1
      %p162 = por %p160, %p161
      %p163 = scmp.ne.s32.totalorder %s155, %s158
      %p164 = scmp.eq.s32.totalorder %s21, 0
      %p165 = por %p163, %p164
      %p166 = scmp.ne.s32.totalorder %s155, %s158
      %p167 = scmp.eq.s32.totalorder %s26, 1
      %p168 = por %p166, %p167
      %p169 = scmp.ne.s32.totalorder %s158, %s159
      %p170 = scmp.eq.s32.totalorder %s26, 0
      %p171 = por %p169, %p170
      %p172 = scmp.ne.s32.totalorder %s158, %s159
      %p173 = scmp.eq.s32.totalorder %s27, 1
      %p174 = por %p172, %p173
      %p176 = scmp.ne.s32.totalorder %s159, %s175
      %p177 = scmp.eq.s32.totalorder %s27, 0
      %p178 = por %p176, %p177
      %s179 = ssub.s32 %s28, %s40
      %s180 = ssub.s32 %s29, %s36
      %s181 = sor.u32 %s179, %s180
      %p182 = scmp.eq.s32.totalorder %s181, 0
      %s184 = sadd.s32 %s183, 1
      %s185 = scalar_select %p182, %s183, %s184
      %p188 = pneg %p182
      %p189 = scmp.eq.s32.totalorder %s21, 1
      %p190 = por %p188, %p189
      %p191 = scmp.ne.s32.totalorder %s183, %s186
      %p192 = scmp.eq.s32.totalorder %s21, 0
      %p193 = por %p191, %p192
      %p194 = scmp.ne.s32.totalorder %s183, %s186
      %p195 = scmp.eq.s32.totalorder %s26, 1
      %p196 = por %p194, %p195
      %p197 = scmp.ne.s32.totalorder %s186, %s187
      %p198 = scmp.eq.s32.totalorder %s26, 0
      %p199 = por %p197, %p198
      %p200 = scmp.ne.s32.totalorder %s186, %s187
      %p201 = scmp.eq.s32.totalorder %s27, 1
      %p202 = por %p200, %p201
      %p204 = scmp.ne.s32.totalorder %s187, %s203
      %p205 = scmp.eq.s32.totalorder %s27, 0
      %p206 = por %p204, %p205
      %p207 = scmp.le.s32.totalorder 1, %s21
      %p208 = scmp.lt.s32.totalorder %s21, 3
      %p209 = pnand %p207, %p208
      %p210 = pneg %p209
      // Predicated region
      $region9: #{kd_loss.1} parent=5 // pred_check
        _
      $region10: #{kd_loss.1} parent=5 // pred_check_branch
        %212 = sbr.rel (%p209) target = $region12
      $region11: #{kd_loss.1} parent=5 // pred_region
        %s213 = ssub.s32 %s21, 1
      $region12: #{kd_loss.1} parent=5 // pred_fallthru
        _
      %p214 = scmp.lt.s32.totalorder %s21, 2
      // Predicated region
      $region13: #{kd_loss.1} parent=5 // pred_check
        %p215 = pneg %p214
      $region14: #{kd_loss.1} parent=5 // pred_check_branch
        %217 = sbr.rel (%p215) target = $region16
      $region15: #{kd_loss.1} parent=5 // pred_region
        // Predicated region
        $region17: #{kd_loss.1} parent=15 // pred_check
          %p218 = pneg %p55
        $region18: #{kd_loss.1} parent=15 // pred_check_branch
          %220 = sbr.rel (%p218) target = $region20
        $region19: #{kd_loss.1} parent=15 // pred_region
          %s221 = sand.u32 %s45, 1
          %s222 = scalar_lea.sflag [#allocation3], %s221
          %s223 = sand.u32 %s45, 1
          %s224 = smul.addr %s223, 48
          %s225 = scalar_lea.vmem [#allocation2], %s224
          %s226 = smul.u32 2, %s29
          %228 = vsyncadd %s222, 0
          %s229 = smul.addr %s28, 6
          %s230 = sadd.s32 %s226, %s229
          %s231 = smul.addr %s230, 8
          %s232 = scalar_lea.hbm %s0, %s231
          %s233 = sshll.u32 %s232, 4
          %s234 = int_to_ptr.hbm [resolvable:$true] %s233
          %s235 = sshll.u32 %s225, 4
          %s236 = int_to_ptr.vmem [resolvable:$true] %s235
          %241 = dma.hbm_to_vmem [thread:$0]  %s234, 768, %s236, %s222, 128, 128, 8
        $region20: #{kd_loss.1} parent=15 // pred_fallthru
          _
        // Predicated region
        $region21: #{kd_loss.1} parent=15 // pred_check
          %p242 = pneg %p83
        $region22: #{kd_loss.1} parent=15 // pred_check_branch
          %244 = sbr.rel (%p242) target = $region24
        $region23: #{kd_loss.1} parent=15 // pred_region
          %s245 = sand.u32 %s21, 1
          %s246 = scalar_lea.sflag [#allocation5], %s245
          %s247 = sand.u32 %s73, 1
          %s248 = smul.addr %s247, 32
          %s249 = scalar_lea.vmem [#allocation4], %s248
          %s250 = smul.u32 2, %s29
          %252 = vsyncadd %s246, 0
          %s253 = smul.addr %s28, 4
          %s254 = sadd.s32 %s250, %s253
          %s255 = smul.addr %s254, 8
          %s256 = scalar_lea.hbm %s1, %s255
          %s257 = sshll.u32 %s256, 4
          %s258 = int_to_ptr.hbm [resolvable:$true] %s257
          %s259 = sshll.u32 %s249, 4
          %s260 = int_to_ptr.vmem [resolvable:$true] %s259
          %265 = dma.hbm_to_vmem [thread:$0]  %s258, 512, %s260, %s246, 128, 128, 8
        $region24: #{kd_loss.1} parent=15 // pred_fallthru
          _
        // Predicated region
        $region25: #{kd_loss.1} parent=15 // pred_check
          %p266 = pneg %p111
        $region26: #{kd_loss.1} parent=15 // pred_check_branch
          %268 = sbr.rel (%p266) target = $region28
        $region27: #{kd_loss.1} parent=15 // pred_region
          %s269 = sand.u32 %s21, 1
          %s270 = scalar_lea.sflag [#allocation5], %s269
          %s271 = sand.u32 %s101, 1
          %s272 = smul.addr %s271, 16
          %s273 = scalar_lea.vmem [#allocation6], %s272
          %s274 = smul.u32 2, %s29
          %276 = vsyncadd %s270, 0
          %s277 = smul.addr %s28, 2
          %s278 = sadd.s32 %s274, %s277
          %s279 = smul.addr %s278, 8
          %s280 = scalar_lea.hbm %s2, %s279
          %s281 = sshll.u32 %s280, 4
          %s282 = int_to_ptr.hbm [resolvable:$true] %s281
          %s283 = sshll.u32 %s273, 4
          %s284 = int_to_ptr.vmem [resolvable:$true] %s283
          %289 = dma.hbm_to_vmem [thread:$0]  %s282, 256, %s284, %s270, 128, 128, 8
        $region28: #{kd_loss.1} parent=15 // pred_fallthru
          _
        // Predicated region
        $region29: #{kd_loss.1} parent=15 // pred_check
          %p290 = pneg %p139
        $region30: #{kd_loss.1} parent=15 // pred_check_branch
          %292 = sbr.rel (%p290) target = $region32
        $region31: #{kd_loss.1} parent=15 // pred_region
          %s293 = sand.u32 %s129, 1
          %s294 = scalar_lea.sflag [#allocation8], %s293
          %s295 = sand.u32 %s129, 1
          %s296 = smul.addr %s295, 16
          %s297 = scalar_lea.vmem [#allocation7], %s296
          %s298 = smul.u32 2, %s29
          %300 = vsyncadd %s294, 0
          %s301 = smul.addr %s28, 2
          %s302 = sadd.s32 %s298, %s301
          %s303 = smul.addr %s302, 8
          %s304 = scalar_lea.hbm %s3, %s303
          %s305 = sshll.u32 %s304, 4
          %s306 = int_to_ptr.hbm [resolvable:$true] %s305
          %s307 = sshll.u32 %s297, 4
          %s308 = int_to_ptr.vmem [resolvable:$true] %s307
          %313 = dma.hbm_to_vmem [thread:$0]  %s306, 256, %s308, %s294, 128, 128, 8
        $region32: #{kd_loss.1} parent=15 // pred_fallthru
          _
      $region16: #{kd_loss.1} parent=5 // pred_fallthru
        _
      %p314 = scmp.le.s32.totalorder 1, %s21
      %p315 = scmp.lt.s32.totalorder %s21, 3
      %p316 = pnand %p314, %p315
      %p317 = pneg %p316
      // Predicated region
      $region33: #{kd_loss.1} parent=5 // pred_check
        _
      $region34: #{kd_loss.1} parent=5 // pred_check_branch
        %319 = sbr.rel (%p316) target = $region36
      $region35: #{kd_loss.1} parent=5 // pred_region
        %s320 = ssub.s32 %s21, 1
        %s321 = sand.u32 %s48, 1
        %s322 = scalar_lea.sflag [#allocation3], %s321
        %s323 = sand.u32 %s48, 1
        %s324 = smul.addr %s323, 48
        %s325 = scalar_lea.vmem [#allocation2], %s324
        // Predicated region
        $region37: #{kd_loss.1} parent=35 // pred_check
          %p326 = pneg %p61
        $region38: #{kd_loss.1} parent=35 // pred_check_branch
          %328 = sbr.rel (%p326) target = $region40
        $region39: #{kd_loss.1} parent=35 // pred_region
          %330 = dma.done %s322, 768
        $region40: #{kd_loss.1} parent=35 // pred_fallthru
          _
        %s331 = sand.u32 %s26, 1
        %s332 = scalar_lea.sflag [#allocation5], %s331
        %s333 = sand.u32 %s76, 1
        %s334 = smul.addr %s333, 32
        %s335 = scalar_lea.vmem [#allocation4], %s334
        // Predicated region
        $region41: #{kd_loss.1} parent=35 // pred_check
          %p336 = pneg %p89
        $region42: #{kd_loss.1} parent=35 // pred_check_branch
          %338 = sbr.rel (%p336) target = $region44
        $region43: #{kd_loss.1} parent=35 // pred_region
          %340 = dma.done %s332, 512
        $region44: #{kd_loss.1} parent=35 // pred_fallthru
          _
        %s341 = sand.u32 %s26, 1
        %s342 = scalar_lea.sflag [#allocation5], %s341
        %s343 = sand.u32 %s104, 1
        %s344 = smul.addr %s343, 16
        %s345 = scalar_lea.vmem [#allocation6], %s344
        // Predicated region
        $region45: #{kd_loss.1} parent=35 // pred_check
          %p346 = pneg %p117
        $region46: #{kd_loss.1} parent=35 // pred_check_branch
          %348 = sbr.rel (%p346) target = $region48
        $region47: #{kd_loss.1} parent=35 // pred_region
          %350 = dma.done %s342, 256
        $region48: #{kd_loss.1} parent=35 // pred_fallthru
          _
        %s351 = sand.u32 %s132, 1
        %s352 = scalar_lea.sflag [#allocation8], %s351
        %s353 = sand.u32 %s132, 1
        %s354 = smul.addr %s353, 16
        %s355 = scalar_lea.vmem [#allocation7], %s354
        // Predicated region
        $region49: #{kd_loss.1} parent=35 // pred_check
          %p356 = pneg %p145
        $region50: #{kd_loss.1} parent=35 // pred_check_branch
          %358 = sbr.rel (%p356) target = $region52
        $region51: #{kd_loss.1} parent=35 // pred_region
          %360 = dma.done %s352, 256
        $region52: #{kd_loss.1} parent=35 // pred_fallthru
          _
        %s361 = sand.u32 %s48, 1
        %s362 = scalar_lea.sflag [#allocation3], %s361
        %s363 = sand.u32 %s48, 1
        %s364 = smul.addr %s363, 48
        %s365 = scalar_lea.vmem [#allocation2], %s364
        %p366 = pneg %p61
        %p367 = pneg %p58
        %s368 = sand.u32 %s26, 1
        %s369 = scalar_lea.sflag [#allocation5], %s368
        %s370 = sand.u32 %s76, 1
        %s371 = smul.addr %s370, 32
        %s372 = scalar_lea.vmem [#allocation4], %s371
        %p373 = pneg %p89
        %p374 = pneg %p86
        %s375 = sand.u32 %s26, 1
        %s376 = scalar_lea.sflag [#allocation5], %s375
        %s377 = sand.u32 %s104, 1
        %s378 = smul.addr %s377, 16
        %s379 = scalar_lea.vmem [#allocation6], %s378
        %p380 = pneg %p117
        %p381 = pneg %p114
        %s382 = sand.u32 %s132, 1
        %s383 = scalar_lea.sflag [#allocation8], %s382
        %s384 = sand.u32 %s132, 1
        %s385 = smul.addr %s384, 16
        %s386 = scalar_lea.vmem [#allocation7], %s385
        %p387 = pneg %p145
        %p388 = pneg %p142
        %p389 = pneg %p171
        %p390 = pneg %p168
        %p391 = scmp.lt.s32.totalorder %s30, 1
        %s392 = scalar_select %p391, %s30, 1
        %s393 = smul.addr %s392, 8
        %s394 = smul.addr %s393, 8
        %s395 = scalar_lea.vmem %s4, %s394
        %p396 = pneg %p199
        %p397 = pneg %p196
        %s398 = smul.u32 2, %s31
        %p399 = scmp.lt.s32.totalorder %s30, 1
        %s400 = scalar_select %p399, %s30, 1
        %p401 = scmp.lt.s32.totalorder %s398, 1
        %s402 = scalar_select %p401, %s398, 1
        %s403 = smul.addr %s400, 2
        %s404 = sadd.s32 %s402, %s403
        %s405 = smul.addr %s404, 8
        %s406 = scalar_lea.vmem %s5, %s405
        %s407 = smul.u32 2, %s31
        %s408 = smul.u32 2, %s31
        %s409 = smul.u32 2, %s31
        %s410 = smul.u32 2, %s31
        %p411 = scmp.lt.s32.totalorder %s30, 1
        %s412 = scalar_select %p411, %s30, 1
        %s413 = smul.addr %s412, 8
        %s414 = smul.addr %s413, 8
        %s415 = scalar_lea.vmem %s4, %s414
        %s416 = smul.u32 2, %s31
        %p417 = scmp.lt.s32.totalorder %s30, 1
        %s418 = scalar_select %p417, %s30, 1
        %p419 = scmp.lt.s32.totalorder %s416, 1
        %s420 = scalar_select %p419, %s416, 1
        %s421 = smul.addr %s418, 2
        %s422 = sadd.s32 %s420, %s421
        %s423 = smul.addr %s422, 8
        %s424 = scalar_lea.vmem %s5, %s423
        %s425 = smul.u32 2, %s31
        %p426 = scmp.eq.s32.totalorder %s31, 0
        // Predicated region
        $region53: #{kd_loss.1} parent=35 // pred_check
          %p427 = pneg %p426
        $region54: #{kd_loss.1} parent=35 // pred_check_branch
          %429 = sbr.rel (%p427) target = $region56
        $region55: #{kd_loss.1} parent=35 // pred_region
          %vm430 = vcmask 130048
          %431 = vst.msk [vmem:[%s415] sm:$0xff] %vm430, 0.0
          %432 = vst.msk [vmem:[%s415 + $0x8] sm:$0xff] %vm430, 0.0
          %433 = vst.msk [vmem:[%s415 + $0x10] sm:$0xff] %vm430, 0.0
          %434 = vst.msk [vmem:[%s415 + $0x18] sm:$0xff] %vm430, 0.0
          %435 = vst.msk [vmem:[%s415 + $0x20] sm:$0xff] %vm430, 0.0
          %436 = vst.msk [vmem:[%s415 + $0x28] sm:$0xff] %vm430, 0.0
          %437 = vst.msk [vmem:[%s415 + $0x30] sm:$0xff] %vm430, 0.0
          %438 = vst.msk [vmem:[%s415 + $0x38] sm:$0xff] %vm430, 0.0
        $region56: #{kd_loss.1} parent=35 // pred_fallthru
          _
        %v439 = vld [vmem:[%s325] sm:$0xff]
        %v440 = vld [vmem:[%s325 + $0x8] sm:$0xff]
        %s441 = scalar_lea.vmem %s325, 16 [#allocation2]
        %v442 = vld [vmem:[%s441] sm:$0xff]
        %v443 = vld [vmem:[%s441 + $0x8] sm:$0xff]
        %s444 = scalar_lea.vmem %s325, 32 [#allocation2]
        %v445 = vld [vmem:[%s444] sm:$0xff]
        %v446 = vld [vmem:[%s444 + $0x8] sm:$0xff]
        %v447 = vld [vmem:[%s335] sm:$0xff]
        %v448 = vld [vmem:[%s335 + $0x8] sm:$0xff]
        %s449 = scalar_lea.vmem %s335, 16 [#allocation4]
        %v450 = vld [vmem:[%s449] sm:$0xff]
        %v451 = vld [vmem:[%s449 + $0x8] sm:$0xff]
        %v452 = vld [vmem:[%s345] sm:$0xff]
        %v453 = vld [vmem:[%s345 + $0x8] sm:$0xff]
        %v454 = vld [vmem:[%s355] sm:$0xff]
        %v455 = vld [vmem:[%s355 + $0x8] sm:$0xff]
        %v456 = vsub.f32 %v447, %v450
        %v457 = vsub.f32 %v448, %v451
        %v458 = vmul.f32 %v456, -50.0
        %v459 = vmul.f32 %v457, -50.0
        %v460 = vmul.f32 %v458, 1.442695
        %v461 = vpow.pop %v460
        %v462 = vmul.f32 %v459, 1.442695
        %v463 = vpow.pop %v462
        %v464 = vadd.f32 %v461, 1.0
        %v465 = vadd.f32 %v463, 1.0
        %v466 = vrcp.pop %v464
        %v467 = vmul.f32 %v464, %v466
        %v468 = vsub.f32 1.0, %v467
        %v469 = vmul.f32 %v466, %v468
        %v470 = vadd.f32 %v466, %v469
        %vm471 = vweird.f32 %v464
        %vm472 = vweird.f32 %v466
        %vm473 = vmor %vm471, %vm472
        %v474 = vsel %vm473, %v466, %v470
        %v475 = vand.u32 2147483647, %v464
        %vm476 = vcmp.eq.f32.partialorder %v475, 8.507059e+37
        %v477 = vand.u32 %v464, 2147483648
        %v478 = vor.u32 1.1754944e-38, %v477
        %v479 = vsel %vm476, %v478, %v474
        %v480 = vrcp.pop %v465
        %v481 = vmul.f32 %v465, %v480
        %v482 = vsub.f32 1.0, %v481
        %v483 = vmul.f32 %v480, %v482
        %v484 = vadd.f32 %v480, %v483
        %vm485 = vweird.f32 %v465
        %vm486 = vweird.f32 %v480
        %vm487 = vmor %vm485, %vm486
        %v488 = vsel %vm487, %v480, %v484
        %v489 = vand.u32 2147483647, %v465
        %vm490 = vcmp.eq.f32.partialorder %v489, 8.507059e+37
        %v491 = vand.u32 %v465, 2147483648
        %v492 = vor.u32 1.1754944e-38, %v491
        %v493 = vsel %vm490, %v492, %v488
        %v494 = vlog2.pop %v439
        %v495 = vmul.f32 %v494, 0.6931472
        %v496 = vlog2.pop %v440
        %v497 = vmul.f32 %v496, 0.6931472
        %v498 = vmax.f32 %v495, -100.0
        %v499 = vmax.f32 %v497, -100.0
        %v500 = vsub.f32 1.0, %v439
        %v501 = vsub.f32 1.0, %v440
        %v502 = vlog2.pop %v500
        %v503 = vmul.f32 %v502, 0.6931472
        %v504 = vlog2.pop %v501
        %v505 = vmul.f32 %v504, 0.6931472
        %v506 = vmax.f32 %v503, -100.0
        %v507 = vmax.f32 %v505, -100.0
        %v508 = vmul.f32 %v447, %v498
        %v509 = vmul.f32 %v448, %v499
        %v510 = vsub.f32 1.0, %v447
        %v511 = vsub.f32 1.0, %v448
        %v512 = vmul.f32 %v510, %v506
        %v513 = vmul.f32 %v511, %v507
        %v514 = vadd.f32 %v508, %v512
        %v515 = vadd.f32 %v509, %v513
        %v516 = vsub.f32 0.0, %v514
        %v517 = vsub.f32 0.0, %v515
        %v518 = vmul.f32 %v447, %v452
        %v519 = vmul.f32 %v448, %v453
        %v520 = vfloor.f32 %v518
        %v521 = vfloor.f32 %v519
        %v522 = vmul.f32 %v510, %v452
        %v523 = vmul.f32 %v511, %v453
        %v524 = vfloor.f32 %v522
        %v525 = vfloor.f32 %v523
        %v526 = vmul.f32 %v516, %v520
        %v527 = vmul.f32 %v517, %v521
        %v528 = vmul.f32 %v516, %v524
        %v529 = vmul.f32 %v517, %v525
        %vm530 = vcmask 130048
        %531 = vst.msk [vmem:[%s424] sm:$0xff] %vm530, %v528
        %532 = vst.msk [vmem:[%s424 + $0x8] sm:$0xff] %vm530, %v529
        %v533 = vld [vmem:[%s415] sm:$0xff]
        %v534 = vsel %vm530, %v520, 0.0
        %v535 = vsel %vm530, %v521, 0.0
        %v536 = vadd.f32 %v534, %v535
        %v537 = vadd.f32 %v533, %v536
        %538 = vst.msk [vmem:[%s415] sm:$0xff] %vm530, %v537
        %s539 = scalar_lea.vmem %s415, 8
        %v540 = vld [vmem:[%s539] sm:$0xff]
        %v541 = vsel %vm530, %v524, 0.0
        %v542 = vsel %vm530, %v525, 0.0
        %v543 = vadd.f32 %v541, %v542
        %v544 = vadd.f32 %v540, %v543
        %545 = vst.msk [vmem:[%s539] sm:$0xff] %vm530, %v544
        %s546 = scalar_lea.vmem %s415, 16
        %v547 = vld [vmem:[%s546] sm:$0xff]
        %v548 = vsel %vm530, %v526, 0.0
        %v549 = vsel %vm530, %v527, 0.0
        %v550 = vadd.f32 %v548, %v549
        %v551 = vadd.f32 %v547, %v550
        %552 = vst.msk [vmem:[%s546] sm:$0xff] %vm530, %v551
        %s553 = scalar_lea.vmem %s415, 24
        %v554 = vld [vmem:[%s553] sm:$0xff]
        %v555 = vsub.f32 %v442, %v450
        %v556 = vsub.f32 %v443, %v451
        %v557 = vand.u32 2147483647, %v555
        %v558 = vand.u32 2147483647, %v556
        %v559 = vmul.f32 %v557, %v454
        %v560 = vmul.f32 %v558, %v455
        %v561 = vsel %vm530, %v559, 0.0
        %v562 = vsel %vm530, %v560, 0.0
        %v563 = vadd.f32 %v561, %v562
        %v564 = vadd.f32 %v554, %v563
        %565 = vst.msk [vmem:[%s553] sm:$0xff] %vm530, %v564
        %s566 = scalar_lea.vmem %s415, 32
        %v567 = vld [vmem:[%s566] sm:$0xff]
        %v568 = vsel %vm530, %v454, 0.0
        %v569 = vsel %vm530, %v455, 0.0
        %v570 = vadd.f32 %v568, %v569
        %v571 = vadd.f32 %v567, %v570
        %572 = vst.msk [vmem:[%s566] sm:$0xff] %vm530, %v571
        %s573 = scalar_lea.vmem %s415, 40
        %v574 = vld [vmem:[%s573] sm:$0xff]
        %v575 = vmul.f32 %v445, %v479
        %v576 = vmul.f32 %v446, %v493
        %v577 = vmul.f32 %v575, %v452
        %v578 = vmul.f32 %v576, %v453
        %v579 = vsel %vm530, %v577, 0.0
        %v580 = vsel %vm530, %v578, 0.0
        %v581 = vadd.f32 %v579, %v580
        %v582 = vadd.f32 %v574, %v581
        %583 = vst.msk [vmem:[%s573] sm:$0xff] %vm530, %v582
        %s584 = scalar_lea.vmem %s415, 48
        %v585 = vld [vmem:[%s584] sm:$0xff]
        %v586 = vmul.f32 %v445, %v452
        %v587 = vmul.f32 %v446, %v453
        %v588 = vsel %vm530, %v586, 0.0
        %v589 = vsel %vm530, %v587, 0.0
        %v590 = vadd.f32 %v588, %v589
        %v591 = vadd.f32 %v585, %v590
        %592 = vst.msk [vmem:[%s584] sm:$0xff] %vm530, %v591
        %s593 = scalar_lea.vmem %s415, 56
        %v594 = vld [vmem:[%s593] sm:$0xff]
        %v595 = vmul.f32 %v479, %v452
        %v596 = vmul.f32 %v493, %v453
        %v597 = vsel %vm530, %v595, 0.0
        %v598 = vsel %vm530, %v596, 0.0
        %v599 = vadd.f32 %v597, %v598
        %v600 = vadd.f32 %v594, %v599
        %601 = vst.msk [vmem:[%s593] sm:$0xff] %vm530, %v600
        %p602 = scmp.lt.s32.totalorder %s30, 1
        %s603 = scalar_select %p602, %s30, 1
        %s604 = smul.addr %s603, 8
        %s605 = smul.addr %s604, 8
        %s606 = scalar_lea.vmem %s4, %s605
        %s607 = smul.u32 2, %s31
        %p608 = scmp.lt.s32.totalorder %s30, 1
        %s609 = scalar_select %p608, %s30, 1
        %p610 = scmp.lt.s32.totalorder %s607, 1
        %s611 = scalar_select %p610, %s607, 1
        %s612 = smul.addr %s609, 2
        %s613 = sadd.s32 %s611, %s612
        %s614 = smul.addr %s613, 8
        %s615 = scalar_lea.vmem %s5, %s614
        // Predicated region
        $region57: #{kd_loss.1} parent=35 // pred_check
          %p616 = pneg %p168
        $region58: #{kd_loss.1} parent=35 // pred_check_branch
          %618 = sbr.rel (%p616) target = $region60
        $region59: #{kd_loss.1} parent=35 // pred_region
          _
        $region60: #{kd_loss.1} parent=35 // pred_fallthru
          _
        // Predicated region
        $region61: #{kd_loss.1} parent=35 // pred_check
          %p619 = pneg %p196
        $region62: #{kd_loss.1} parent=35 // pred_check_branch
          %621 = sbr.rel (%p619) target = $region64
        $region63: #{kd_loss.1} parent=35 // pred_region
          %s622 = smul.u32 2, %s31
        $region64: #{kd_loss.1} parent=35 // pred_fallthru
          _
      $region36: #{kd_loss.1} parent=5 // pred_fallthru
        _
      %p623 = scmp.le.s32.totalorder 2, %s21
      // Predicated region
      $region65: #{kd_loss.1} parent=5 // pred_check
        %p624 = pneg %p623
      $region66: #{kd_loss.1} parent=5 // pred_check_branch
        %626 = sbr.rel (%p624) target = $region68
      $region67: #{kd_loss.1} parent=5 // pred_region
        %s627 = ssub.s32 %s21, 2
        // Predicated region
        $region69: #{kd_loss.1} parent=67 // pred_check
          %p628 = pneg %p174
        $region70: #{kd_loss.1} parent=67 // pred_check_branch
          %630 = sbr.rel (%p628) target = $region72
        $region71: #{kd_loss.1} parent=67 // pred_region
          %p631 = scmp.lt.s32.totalorder %s32, 1
          %s632 = scalar_select %p631, %s32, 1
          %s633 = smul.addr %s632, 8
          %s634 = smul.addr %s633, 8
          %s635 = scalar_lea.vmem %s4, %s634
        $region72: #{kd_loss.1} parent=67 // pred_fallthru
          _
        // Predicated region
        $region73: #{kd_loss.1} parent=67 // pred_check
          %p636 = pneg %p202
        $region74: #{kd_loss.1} parent=67 // pred_check_branch
          %638 = sbr.rel (%p636) target = $region76
        $region75: #{kd_loss.1} parent=67 // pred_region
          %s639 = smul.u32 2, %s33
          %p640 = scmp.lt.s32.totalorder %s32, 1
          %s641 = scalar_select %p640, %s32, 1
          %p642 = scmp.lt.s32.totalorder %s639, 1
          %s643 = scalar_select %p642, %s639, 1
          %s644 = smul.addr %s641, 2
          %s645 = sadd.s32 %s643, %s644
          %s646 = smul.addr %s645, 8
          %s647 = scalar_lea.vmem %s5, %s646
        $region76: #{kd_loss.1} parent=67 // pred_fallthru
          _
      $region68: #{kd_loss.1} parent=5 // pred_fallthru
        _
    $region6: #{kd_loss.1} parent=1 // loop_footer
      %s25 = sadd.s32 1, %s21
    $region7: #{kd_loss.1} parent=1 // loop_footer_branch
      %20 = sbr.rel target = $region3
    $region8: #{kd_loss.1} parent=1 // loop_exit
      _
    %648 = vsyncpa [#allocation3], 1
    %s649 = scalar_lea.sflag [#allocation3], 1
    %650 = vsyncpa %s649, 1
    %651 = vsyncpa [#allocation5], 1
    %s652 = scalar_lea.sflag [#allocation5], 1
    %653 = vsyncpa %s652, 1
    %654 = vsyncpa [#allocation8], 1
    %s655 = scalar_lea.sflag [#allocation8], 1
    %656 = vsyncpa %s655, 1

</llo_original>
